<compile_context>
chip_gen: v6e
topology: v6e:2x2x1
jax: 0.10.0
libtpu: 0.0.40
codegen_flags: <defaults>
</compile_context>

<pallas_src>
import jax
import jax.numpy as jnp
from jax import lax
from jax.experimental import pallas as pl
from jax.experimental.pallas import tpu as pltpu

EPS = 1e-8  # matches PyTorch F.cosine_similarity eps


# ----------------------------- Pallas kernel ------------------------------ #
def prompt_kernel(query_ref, attn_ref, keys_ref, knorm2_ref, prompts_ref, out_ref):
    q = query_ref[...]        # (B, D)   batch of queries
    a = attn_ref[...]         # (T, D)   per-task attention vectors
    k = keys_ref[...]         # (T, D)   per-task keys
    nk2 = knorm2_ref[...]     # (1, T)   precomputed sum(keys**2, -1) (hoisted)
    pf = prompts_ref[...]     # (T, P*D) lane-dense flat prompts

    T = a.shape[0]
    acc = jnp.zeros(out_ref.shape, jnp.float32)          # (B, P*D)

    # Static unroll over tasks (T is small).  All intermediates stay 2D:
    # lane reductions over D, sublane broadcast of the per-task row, and a
    # per-sublane scalar multiply of the lane-dense flat prompt row.
    # For large T, replace the unrolled loop with an MXU contraction:
    #   out_ref[...] = jnp.dot(sim_BT, pf, preferred_element_type=jnp.float32)
    for t in range(T):
        x = q * a[t:t + 1, :]                                       # (B, D)
        dot = jnp.sum(x * k[t:t + 1, :], axis=-1, keepdims=True)    # (B, 1)
        nx2 = jnp.sum(x * x, axis=-1, keepdims=True)                # (B, 1)
        # cosine sim: dot / max(|x||k|, eps) == dot * rsqrt(max(|x|^2|k|^2, eps^2))
        denom2 = jnp.maximum(nx2 * nk2[:, t:t + 1], EPS * EPS)      # (B, 1)
        sim = dot * lax.rsqrt(denom2)                               # (B, 1)
        acc = acc + sim * pf[t:t + 1, :]                            # (B, P*D)

    out_ref[...] = acc


def prompt_component_forward(query, attention, keys, prompts):
    """Batched PromptComponent forward.

    query:     (B, D)   B independent queries per call (B=1 == module forward)
    attention: (T, D)
    keys:      (T, D)
    prompts:   (T, P, D)
    returns:   (B, P, D)
    """
    T, P, D = prompts.shape
    B = query.shape[0]
    PD = P * D

    # Lane-dense flat prompt layout (last dim = P*D, multiple of 128 here) and
    # hoisted, query-independent key norms.
    prompts_flat = prompts.reshape(T, PD)
    knorm2 = jnp.sum(keys * keys, axis=-1)[None, :]      # (1, T)

    out_flat = pl.pallas_call(
        prompt_kernel,
        out_shape=jax.ShapeDtypeStruct((B, PD), jnp.float32),
        in_specs=[
            pl.BlockSpec(memory_space=pltpu.MemorySpace.VMEM),   # query
            pl.BlockSpec(memory_space=pltpu.MemorySpace.VMEM),   # attention
            pl.BlockSpec(memory_space=pltpu.MemorySpace.VMEM),   # keys
            pl.BlockSpec(memory_space=pltpu.MemorySpace.VMEM),   # knorm2
            pl.BlockSpec(memory_space=pltpu.MemorySpace.VMEM),   # prompts_flat
        ],
        out_specs=pl.BlockSpec(memory_space=pltpu.MemorySpace.VMEM),
    )(query, attention, keys, knorm2, prompts_flat)

    return out_flat.reshape(B, P, D)


# -------------------------- parameter construction ------------------------ #
def gram_schmidt(p):
    """Matches PromptComponent.gram_schmidt (row-wise, zero on near-degenerate)."""
    n, _ = p.shape
    basis = []
    for i in range(n):
        w = p[i]
        for b in basis:
            w = w - jnp.dot(w, b) * b
        norm = jnp.linalg.norm(w)
        safe = jnp.where(norm > 1e-10, norm, 1.0)
        basis.append(jnp.where(norm > 1e-10, w / safe, jnp.zeros_like(w)))
    return jnp.stack(basis)


def make_params(key, num_tasks, prompt_num, prompt_dim):
    """Mirrors new_task_init() called `num_tasks` times (host-side setup)."""
    attns, keys_n, prompts = [], [], []
    for _ in range(num_tasks):
        key, k1, k2, k3 = jax.random.split(key, 4)
        attns.append(jax.random.normal(k1, (prompt_dim,), jnp.float32))
        new_key = jax.random.normal(k2, (prompt_dim,), jnp.float32)
        keys_n.append(new_key / (jnp.linalg.norm(new_key) + 1e-8))
        prompt_tmp = jax.random.normal(k3, (prompt_num, prompt_dim), jnp.float32)
        prompts.append(gram_schmidt(prompt_tmp))
    return jnp.stack(attns), jnp.stack(keys_n), jnp.stack(prompts)


# ----------------------------- pure-JAX reference -------------------------- #
def reference_forward(query, attention, keys, prompts):
    """query (1, D) -> (P, D); mirrors PromptComponent.forward exactly."""
    T, P, D = prompts.shape
    out = jnp.zeros((P, D), jnp.float32)
    for t in range(T):
        x = query * attention[t][None, :]                   # (1, D)
        dot = jnp.sum(x * keys[t][None, :], axis=-1)        # (1,)
        nx = jnp.linalg.norm(x, axis=-1)
        nk = jnp.linalg.norm(keys[t][None, :], axis=-1)
        sim = dot / jnp.maximum(nx * nk, 1e-8)              # (1,)
        out = out + prompts[t] * sim                        # broadcast scalar
    return out


if __name__ == "__main__":
    # shapes implied by the module: prompt_num=8, prompt_dim=32, 3 tasks,
    # 8 queries batched per pallas_call to amortize launch overhead.
    NUM_TASKS, PROMPT_NUM, PROMPT_DIM = 3, 8, 32
    BATCH = 8

    root = jax.random.PRNGKey(0)
    kq, kp = jax.random.split(root)
    attention, keys, prompts = make_params(kp, NUM_TASKS, PROMPT_NUM, PROMPT_DIM)
    queries = jax.random.normal(kq, (BATCH, PROMPT_DIM), jnp.float32)

    # batched forward (one pallas_call for all BATCH queries)
    out = prompt_component_forward(queries, attention, keys, prompts)
    out = jax.block_until_ready(out)
    assert out.shape == (BATCH, PROMPT_NUM, PROMPT_DIM)
    for b in range(BATCH):
        ref_b = reference_forward(queries[b:b + 1], attention, keys, prompts)
        assert jnp.allclose(out[b], ref_b, atol=1e-5, rtol=1e-5)

    # module-exact single-query path (B = 1)
    single = prompt_component_forward(queries[:1], attention, keys, prompts)
    single = jax.block_until_ready(single)[0]
    ref0 = reference_forward(queries[:1], attention, keys, prompts)
    assert single.shape == (PROMPT_NUM, PROMPT_DIM)
    assert jnp.allclose(single, ref0, atol=1e-5, rtol=1e-5)

    print("KERNEL_OK")
</pallas_src>

<mosaic_0001>
module attributes {stable_mosaic.version = 11 : i64} {
  func.func @prompt_kernel(%arg0: memref<8x32xf32, #tpu.memory_space<vmem>>, %arg1: memref<3x32xf32, #tpu.memory_space<vmem>>, %arg2: memref<3x32xf32, #tpu.memory_space<vmem>>, %arg3: memref<1x3xf32, #tpu.memory_space<vmem>>, %arg4: memref<3x256xf32, #tpu.memory_space<vmem>>, %arg5: memref<8x256xf32, #tpu.memory_space<vmem>>) attributes {dimension_semantics = [], scalar_prefetch = 0 : i64, scratch_operands = 0 : i64, tpu.core_type = #tpu.core_type<tc>} {
    %c0 = arith.constant 0 : index
    %c0_0 = arith.constant 0 : index
    %0 = vector.load %arg0[%c0, %c0_0] : memref<8x32xf32, #tpu.memory_space<vmem>>, vector<8x32xf32>
    %c0_1 = arith.constant 0 : index
    %c0_2 = arith.constant 0 : index
    %1 = vector.load %arg1[%c0_1, %c0_2] : memref<3x32xf32, #tpu.memory_space<vmem>>, vector<3x32xf32>
    %c0_3 = arith.constant 0 : index
    %c0_4 = arith.constant 0 : index
    %2 = vector.load %arg2[%c0_3, %c0_4] : memref<3x32xf32, #tpu.memory_space<vmem>>, vector<3x32xf32>
    %c0_5 = arith.constant 0 : index
    %c0_6 = arith.constant 0 : index
    %3 = vector.load %arg3[%c0_5, %c0_6] : memref<1x3xf32, #tpu.memory_space<vmem>>, vector<1x3xf32>
    %c0_7 = arith.constant 0 : index
    %c0_8 = arith.constant 0 : index
    %4 = vector.load %arg4[%c0_7, %c0_8] : memref<3x256xf32, #tpu.memory_space<vmem>>, vector<3x256xf32>
    %cst = arith.constant 0.000000e+00 : f32
    %5 = vector.broadcast %cst : f32 to vector<8x256xf32>
    %6 = vector.extract_strided_slice %1 {offsets = [0, 0], sizes = [1, 32], strides = [1, 1]} : vector<3x32xf32> to vector<1x32xf32>
    %7 = vector.broadcast %6 : vector<1x32xf32> to vector<8x32xf32>
    %8 = arith.mulf %0, %7 : vector<8x32xf32>
    %9 = vector.extract_strided_slice %2 {offsets = [0, 0], sizes = [1, 32], strides = [1, 1]} : vector<3x32xf32> to vector<1x32xf32>
    %10 = vector.broadcast %9 : vector<1x32xf32> to vector<8x32xf32>
    %11 = arith.mulf %8, %10 : vector<8x32xf32>
    %cst_9 = arith.constant dense<0.000000e+00> : vector<8xf32>
    %12 = vector.multi_reduction <add>, %11, %cst_9 [1] : vector<8x32xf32> to vector<8xf32>
    %13 = vector.shape_cast %12 : vector<8xf32> to vector<8x1xf32>
    %14 = arith.mulf %8, %8 : vector<8x32xf32>
    %cst_10 = arith.constant dense<0.000000e+00> : vector<8xf32>
    %15 = vector.multi_reduction <add>, %14, %cst_10 [1] : vector<8x32xf32> to vector<8xf32>
    %16 = vector.shape_cast %15 : vector<8xf32> to vector<8x1xf32>
    %17 = vector.extract_strided_slice %3 {offsets = [0, 0], sizes = [1, 1], strides = [1, 1]} : vector<1x3xf32> to vector<1x1xf32>
    %18 = vector.broadcast %17 : vector<1x1xf32> to vector<8x1xf32>
    %19 = arith.mulf %16, %18 : vector<8x1xf32>
    %cst_11 = arith.constant 1.000000e-16 : f32
    %20 = vector.broadcast %cst_11 : f32 to vector<8x1xf32>
    %21 = arith.maximumf %19, %20 : vector<8x1xf32>
    %22 = math.rsqrt %21 : vector<8x1xf32>
    %23 = arith.mulf %13, %22 : vector<8x1xf32>
    %24 = vector.extract_strided_slice %4 {offsets = [0, 0], sizes = [1, 256], strides = [1, 1]} : vector<3x256xf32> to vector<1x256xf32>
    %25 = vector.broadcast %23 : vector<8x1xf32> to vector<8x256xf32>
    %26 = vector.broadcast %24 : vector<1x256xf32> to vector<8x256xf32>
    %27 = arith.mulf %25, %26 : vector<8x256xf32>
    %28 = arith.addf %5, %27 : vector<8x256xf32>
    %29 = vector.extract_strided_slice %1 {offsets = [1, 0], sizes = [1, 32], strides = [1, 1]} : vector<3x32xf32> to vector<1x32xf32>
    %30 = vector.broadcast %29 : vector<1x32xf32> to vector<8x32xf32>
    %31 = arith.mulf %0, %30 : vector<8x32xf32>
    %32 = vector.extract_strided_slice %2 {offsets = [1, 0], sizes = [1, 32], strides = [1, 1]} : vector<3x32xf32> to vector<1x32xf32>
    %33 = vector.broadcast %32 : vector<1x32xf32> to vector<8x32xf32>
    %34 = arith.mulf %31, %33 : vector<8x32xf32>
    %cst_12 = arith.constant dense<0.000000e+00> : vector<8xf32>
    %35 = vector.multi_reduction <add>, %34, %cst_12 [1] : vector<8x32xf32> to vector<8xf32>
    %36 = vector.shape_cast %35 : vector<8xf32> to vector<8x1xf32>
    %37 = arith.mulf %31, %31 : vector<8x32xf32>
    %cst_13 = arith.constant dense<0.000000e+00> : vector<8xf32>
    %38 = vector.multi_reduction <add>, %37, %cst_13 [1] : vector<8x32xf32> to vector<8xf32>
    %39 = vector.shape_cast %38 : vector<8xf32> to vector<8x1xf32>
    %40 = vector.extract_strided_slice %3 {offsets = [0, 1], sizes = [1, 1], strides = [1, 1]} : vector<1x3xf32> to vector<1x1xf32>
    %41 = vector.broadcast %40 : vector<1x1xf32> to vector<8x1xf32>
    %42 = arith.mulf %39, %41 : vector<8x1xf32>
    %cst_14 = arith.constant 1.000000e-16 : f32
    %43 = vector.broadcast %cst_14 : f32 to vector<8x1xf32>
    %44 = arith.maximumf %42, %43 : vector<8x1xf32>
    %45 = math.rsqrt %44 : vector<8x1xf32>
    %46 = arith.mulf %36, %45 : vector<8x1xf32>
    %47 = vector.extract_strided_slice %4 {offsets = [1, 0], sizes = [1, 256], strides = [1, 1]} : vector<3x256xf32> to vector<1x256xf32>
    %48 = vector.broadcast %46 : vector<8x1xf32> to vector<8x256xf32>
    %49 = vector.broadcast %47 : vector<1x256xf32> to vector<8x256xf32>
    %50 = arith.mulf %48, %49 : vector<8x256xf32>
    %51 = arith.addf %28, %50 : vector<8x256xf32>
    %52 = vector.extract_strided_slice %1 {offsets = [2, 0], sizes = [1, 32], strides = [1, 1]} : vector<3x32xf32> to vector<1x32xf32>
    %53 = vector.broadcast %52 : vector<1x32xf32> to vector<8x32xf32>
    %54 = arith.mulf %0, %53 : vector<8x32xf32>
    %55 = vector.extract_strided_slice %2 {offsets = [2, 0], sizes = [1, 32], strides = [1, 1]} : vector<3x32xf32> to vector<1x32xf32>
    %56 = vector.broadcast %55 : vector<1x32xf32> to vector<8x32xf32>
    %57 = arith.mulf %54, %56 : vector<8x32xf32>
    %cst_15 = arith.constant dense<0.000000e+00> : vector<8xf32>
    %58 = vector.multi_reduction <add>, %57, %cst_15 [1] : vector<8x32xf32> to vector<8xf32>
    %59 = vector.shape_cast %58 : vector<8xf32> to vector<8x1xf32>
    %60 = arith.mulf %54, %54 : vector<8x32xf32>
    %cst_16 = arith.constant dense<0.000000e+00> : vector<8xf32>
    %61 = vector.multi_reduction <add>, %60, %cst_16 [1] : vector<8x32xf32> to vector<8xf32>
    %62 = vector.shape_cast %61 : vector<8xf32> to vector<8x1xf32>
    %63 = vector.extract_strided_slice %3 {offsets = [0, 2], sizes = [1, 1], strides = [1, 1]} : vector<1x3xf32> to vector<1x1xf32>
    %64 = vector.broadcast %63 : vector<1x1xf32> to vector<8x1xf32>
    %65 = arith.mulf %62, %64 : vector<8x1xf32>
    %cst_17 = arith.constant 1.000000e-16 : f32
    %66 = vector.broadcast %cst_17 : f32 to vector<8x1xf32>
    %67 = arith.maximumf %65, %66 : vector<8x1xf32>
    %68 = math.rsqrt %67 : vector<8x1xf32>
    %69 = arith.mulf %59, %68 : vector<8x1xf32>
    %70 = vector.extract_strided_slice %4 {offsets = [2, 0], sizes = [1, 256], strides = [1, 1]} : vector<3x256xf32> to vector<1x256xf32>
    %71 = vector.broadcast %69 : vector<8x1xf32> to vector<8x256xf32>
    %72 = vector.broadcast %70 : vector<1x256xf32> to vector<8x256xf32>
    %73 = arith.mulf %71, %72 : vector<8x256xf32>
    %74 = arith.addf %51, %73 : vector<8x256xf32>
    %c0_18 = arith.constant 0 : index
    %c0_19 = arith.constant 0 : index
    %75 = vector.load %arg5[%c0_18, %c0_19] : memref<8x256xf32, #tpu.memory_space<vmem>>, vector<8x256xf32>
    tpu.vector_store %arg5[%c0_18, %c0_19], %74 {strides = array<i32>} : memref<8x256xf32, #tpu.memory_space<vmem>>, vector<8x256xf32>,
    return
  }
}

</mosaic_0001>

<llo_original>
// kernel: tpu_custom_call.1
$region0: #{tpu_custom_call.1}
  #allocation0 [shape = 'u32[]', space=smem, size = 0x4, offset = 0x4, fixed_abs, tag = 'smem constant byte address 0x4 - core index']
  #allocation1 [shape = 'u32[144,128]{1,0:T(1,128)}', space=vmem, size = 0x12000, scoped, tag = 'internal scratch']
  %s0 = inlined_call_operand.hbm [shape: f32[8,32], index: 0, kind: input, shape index: {}]
  %s1 = inlined_call_operand.hbm [shape: f32[3,32], index: 1, kind: input, shape index: {}]
  %s2 = inlined_call_operand.hbm [shape: f32[3,32], index: 2, kind: input, shape index: {}]
  %s3 = inlined_call_operand.vmem [shape: f32[1,3], index: 3, kind: input, shape index: {}]
  %s4 = inlined_call_operand.hbm [shape: f32[3,256], index: 4, kind: input, shape index: {}]
  %s5 = inlined_call_operand.hbm [shape: f32[8,256], index: 5, kind: output, shape index: {}]
  %s6 = sld [smem:[#allocation0]]
  $region46: #{tpu_custom_call.1} parent=0
    _
  %s8 = ssub.s32 1, %s6
  %s9 = scalar_select 0, %s8, %s6
  $region1: #{tpu_custom_call.1} parent=0
    #allocation2 [shape = 'u8[4096]{0}', space=vmem, size = 0x1000, scoped, tag = 'input window, operand 0, single buffered']
    #allocation3 [shape = 's32[1]{0}', space=sflag, size = 0x4, scoped, tag = 'scoped memory for tpu_custom_call.1']
    #allocation4 [shape = 's32[1]{0}', space=sflag, size = 0x4, scoped, tag = 'scoped memory for tpu_custom_call.1']
    #allocation5 [shape = 'u8[2048]{0}', space=vmem, size = 0x800, scoped, tag = 'input window, operand 1, single buffered']
    #allocation6 [shape = 's32[1]{0}', space=sflag, size = 0x4, scoped, tag = 'scoped memory for tpu_custom_call.1']
    #allocation7 [shape = 'u8[2048]{0}', space=vmem, size = 0x800, scoped, tag = 'input window, operand 2, single buffered']
    #allocation8 [shape = 'u8[4096]{0}', space=vmem, size = 0x1000, scoped, tag = 'input window, operand 4, single buffered']
    #allocation9 [shape = 's32[1]{0}', space=sflag, size = 0x4, scoped, tag = 'scoped memory for tpu_custom_call.1']
    #allocation10 [shape = 'u8[8192]{0}', space=vmem, size = 0x2000, scoped, tag = 'output window, operand 0, single buffered']
    %10 = vsyncpa [#allocation3], 0
    %11 = vsyncpa [#allocation6], 0
    %12 = vsyncpa [#allocation9], 0
    %13 = vsyncpa [#allocation4], 0
    // Predicated region
    $region2: #{tpu_custom_call.1} parent=1 // pred_check
      _
    $region3: #{tpu_custom_call.1} parent=1 // pred_check_branch
      %15 = sbr.rel (0) target = $region5
    $region4: #{tpu_custom_call.1} parent=1 // pred_region
      %s17 = ssub.s32 128, 128
      %18 = vsyncadd [#allocation3], %s17
      %s20 = sshll.u32 [#allocation2], 4
      %s21 = int_to_ptr.vmem [resolvable:$true] %s20
      %23 = dma.hbm_to_vmem [thread:$0]  %s0, 128, %s21, [#allocation3]
    $region5: #{tpu_custom_call.1} parent=1 // pred_fallthru
      _
    // Predicated region
    $region6: #{tpu_custom_call.1} parent=1 // pred_check
      _
    $region7: #{tpu_custom_call.1} parent=1 // pred_check_branch
      %25 = sbr.rel (0) target = $region9
    $region8: #{tpu_custom_call.1} parent=1 // pred_region
      %s27 = ssub.s32 64, 64
      %28 = vsyncadd [#allocation6], %s27
      %s30 = sshll.u32 [#allocation5], 4
      %s31 = int_to_ptr.vmem [resolvable:$true] %s30
      %33 = dma.hbm_to_vmem [thread:$0]  %s1, 64, %s31, [#allocation6]
    $region9: #{tpu_custom_call.1} parent=1 // pred_fallthru
      _
    // Predicated region
    $region10: #{tpu_custom_call.1} parent=1 // pred_check
      _
    $region11: #{tpu_custom_call.1} parent=1 // pred_check_branch
      %35 = sbr.rel (0) target = $region13
    $region12: #{tpu_custom_call.1} parent=1 // pred_region
      %s37 = ssub.s32 64, 64
      %38 = vsyncadd [#allocation6], %s37
      %s40 = sshll.u32 [#allocation7], 4
      %s41 = int_to_ptr.vmem [resolvable:$true] %s40
      %43 = dma.hbm_to_vmem [thread:$0]  %s2, 64, %s41, [#allocation6]
    $region13: #{tpu_custom_call.1} parent=1 // pred_fallthru
      _
    // Predicated region
    $region14: #{tpu_custom_call.1} parent=1 // pred_check
      _
    $region15: #{tpu_custom_call.1} parent=1 // pred_check_branch
      %45 = sbr.rel (0) target = $region17
    $region16: #{tpu_custom_call.1} parent=1 // pred_region
      _
    $region17: #{tpu_custom_call.1} parent=1 // pred_fallthru
      _
    // Predicated region
    $region18: #{tpu_custom_call.1} parent=1 // pred_check
      _
    $region19: #{tpu_custom_call.1} parent=1 // pred_check_branch
      %47 = sbr.rel (0) target = $region21
    $region20: #{tpu_custom_call.1} parent=1 // pred_region
      %s49 = ssub.s32 128, 128
      %50 = vsyncadd [#allocation9], %s49
      %s52 = sshll.u32 [#allocation8], 4
      %s53 = int_to_ptr.vmem [resolvable:$true] %s52
      %55 = dma.hbm_to_vmem [thread:$0]  %s4, 128, %s53, [#allocation9]
    $region21: #{tpu_custom_call.1} parent=1 // pred_fallthru
      _
    // Predicated region
    $region22: #{tpu_custom_call.1} parent=1 // pred_check
      _
    $region23: #{tpu_custom_call.1} parent=1 // pred_check_branch
      %57 = sbr.rel (0) target = $region25
    $region24: #{tpu_custom_call.1} parent=1 // pred_region
      %58 = dma.done [#allocation3], 128
    $region25: #{tpu_custom_call.1} parent=1 // pred_fallthru
      _
    // Predicated region
    $region26: #{tpu_custom_call.1} parent=1 // pred_check
      _
    $region27: #{tpu_custom_call.1} parent=1 // pred_check_branch
      %60 = sbr.rel (0) target = $region29
    $region28: #{tpu_custom_call.1} parent=1 // pred_region
      %61 = dma.done [#allocation6], 64
    $region29: #{tpu_custom_call.1} parent=1 // pred_fallthru
      _
    // Predicated region
    $region30: #{tpu_custom_call.1} parent=1 // pred_check
      _
    $region31: #{tpu_custom_call.1} parent=1 // pred_check_branch
      %63 = sbr.rel (0) target = $region33
    $region32: #{tpu_custom_call.1} parent=1 // pred_region
      %64 = dma.done [#allocation6], 64
    $region33: #{tpu_custom_call.1} parent=1 // pred_fallthru
      _
    // Predicated region
    $region34: #{tpu_custom_call.1} parent=1 // pred_check
      _
    $region35: #{tpu_custom_call.1} parent=1 // pred_check_branch
      %66 = sbr.rel (0) target = $region37
    $region36: #{tpu_custom_call.1} parent=1 // pred_region
      %67 = dma.done [#allocation9], 128
    $region37: #{tpu_custom_call.1} parent=1 // pred_fallthru
      _
    %v68 = vld [vmem:[#allocation2] sm:$0xff]
    %v69 = vld [vmem:[#allocation5] sm:$0x7]
    %v70 = vld [vmem:[#allocation7] sm:$0x7]
    %v71 = vld [vmem:[%s3] sm:$0x1]
    %v72 = vld [vmem:[#allocation8] sm:$0x77]
    %v73 = vlaneseq
    %v74 = vshrl.u32 %v73, 7
    %v75 = vsub.s32 0, %v74
    %v76 = vrot.slane %v69, %v75
    %v77 = vmul.f32 %v68, %v76
    %v78 = vlaneseq
    %v79 = vshrl.u32 %v78, 7
    %v80 = vsub.s32 0, %v79
    %v81 = vrot.slane %v70, %v80
    %v82 = vmul.f32 %v77, %v81
    %vm83 = vcmask 261120
    %v84 = vsel %vm83, %v82, 0.0
    %85 = vadd.xlane.f32.xlu0 %v84
    %v86 = vpop.xlane.xlu0 %85
    %v87 = vmul.f32 %v77, %v77
    %v88 = vsel %vm83, %v87, 0.0
    %89 = vadd.xlane.f32.xlu0 %v88
    %v90 = vpop.xlane.xlu0 %89
    %v92 = vlaneseq
    %v93 = vshrl.u32 %v92, 7
    %v94 = vsub.s32 0, %v93
    %v95 = vrot.slane %v71, %v94
    %v97 = vmul.f32 %v90, %v95
    %v98 = vmax.f32 %v97, 1e-16
    %v99 = vrsqrt.pop %v98
    %v100 = vmul.f32 %v86, %v99
    %102 = vset.pattern.permute.xlu0 0
    %103 = vperm.xlu0 %102, %v100
    %v104 = vpop.permute.xlu0 %103
    %v107 = vlaneseq
    %v108 = vshrl.u32 %v107, 7
    %v109 = vsub.s32 0, %v108
    %v110 = vrot.slane %v72, %v109
    %v111 = vlaneseq
    %v112 = vshrl.u32 %v111, 7
    %v113 = vsub.s32 4, %v112
    %v114 = vrot.slane %v72, %v113
    %v117 = vlaneseq
    %v118 = vshrl.u32 %v117, 7
    %v119 = vsub.s32 0, %v118
    %v120 = vrot.slane %v110, %v119
    %v121 = vlaneseq
    %v122 = vshrl.u32 %v121, 7
    %v123 = vsub.s32 0, %v122
    %v124 = vrot.slane %v114, %v123
    %v125 = vmul.f32 %v104, %v120
    %v126 = vmul.f32 %v104, %v124
    %v127 = vadd.f32 %v125, 0.0
    %v128 = vadd.f32 %v126, 0.0
    %v129 = vlaneseq
    %v130 = vshrl.u32 %v129, 7
    %v131 = vsub.s32 1, %v130
    %v132 = vrot.slane %v69, %v131
    %v133 = vmul.f32 %v68, %v132
    %v134 = vlaneseq
    %v135 = vshrl.u32 %v134, 7
    %v136 = vsub.s32 1, %v135
    %v137 = vrot.slane %v70, %v136
    %v138 = vmul.f32 %v133, %v137
    %v139 = vsel %vm83, %v138, 0.0
    %140 = vadd.xlane.f32.xlu0 %v139
    %v141 = vpop.xlane.xlu0 %140
    %v142 = vmul.f32 %v133, %v133
    %v143 = vsel %vm83, %v142, 0.0
    %144 = vadd.xlane.f32.xlu0 %v143
    %v145 = vpop.xlane.xlu0 %144
    %v146 = vmul.f32 %v145, %v95
    %v147 = vmax.f32 %v146, 1e-16
    %v148 = vrsqrt.pop %v147
    %v149 = vmul.f32 %v141, %v148
    %151 = vset.pattern.permute.xlu0 1
    %152 = vperm.xlu0 %151, %v149
    %v153 = vpop.permute.xlu0 %152
    %v155 = vlaneseq
    %v156 = vshrl.u32 %v155, 7
    %v157 = vsub.s32 1, %v156
    %v158 = vrot.slane %v72, %v157
    %v159 = vlaneseq
    %v160 = vshrl.u32 %v159, 7
    %v161 = vsub.s32 5, %v160
    %v162 = vrot.slane %v72, %v161
    %v165 = vlaneseq
    %v166 = vshrl.u32 %v165, 7
    %v167 = vsub.s32 1, %v166
    %v168 = vrot.slane %v158, %v167
    %v169 = vlaneseq
    %v170 = vshrl.u32 %v169, 7
    %v171 = vsub.s32 1, %v170
    %v172 = vrot.slane %v162, %v171
    %v173 = vmul.f32 %v153, %v168
    %v174 = vmul.f32 %v153, %v172
    %v175 = vadd.f32 %v127, %v173
    %v176 = vadd.f32 %v128, %v174
    %v177 = vlaneseq
    %v178 = vshrl.u32 %v177, 7
    %v179 = vsub.s32 2, %v178
    %v180 = vrot.slane %v69, %v179
    %v181 = vmul.f32 %v68, %v180
    %v182 = vlaneseq
    %v183 = vshrl.u32 %v182, 7
    %v184 = vsub.s32 2, %v183
    %v185 = vrot.slane %v70, %v184
    %v186 = vmul.f32 %v181, %v185
    %v187 = vsel %vm83, %v186, 0.0
    %188 = vadd.xlane.f32.xlu0 %v187
    %v189 = vpop.xlane.xlu0 %188
    %v190 = vmul.f32 %v181, %v181
    %v191 = vsel %vm83, %v190, 0.0
    %192 = vadd.xlane.f32.xlu0 %v191
    %v193 = vpop.xlane.xlu0 %192
    %v194 = vmul.f32 %v193, %v95
    %v195 = vmax.f32 %v194, 1e-16
    %v196 = vrsqrt.pop %v195
    %v197 = vmul.f32 %v189, %v196
    %199 = vset.pattern.permute.xlu0 2
    %200 = vperm.xlu0 %199, %v197
    %v201 = vpop.permute.xlu0 %200
    %v203 = vlaneseq
    %v204 = vshrl.u32 %v203, 7
    %v205 = vsub.s32 2, %v204
    %v206 = vrot.slane %v72, %v205
    %v207 = vlaneseq
    %v208 = vshrl.u32 %v207, 7
    %v209 = vsub.s32 6, %v208
    %v210 = vrot.slane %v72, %v209
    %v213 = vlaneseq
    %v214 = vshrl.u32 %v213, 7
    %v215 = vsub.s32 2, %v214
    %v216 = vrot.slane %v206, %v215
    %v217 = vlaneseq
    %v218 = vshrl.u32 %v217, 7
    %v219 = vsub.s32 2, %v218
    %v220 = vrot.slane %v210, %v219
    %v221 = vmul.f32 %v201, %v216
    %v222 = vmul.f32 %v201, %v220
    %v223 = vadd.f32 %v175, %v221
    %v224 = vadd.f32 %v176, %v222
    %225 = vst [vmem:[#allocation10] sm:$0xff] %v223
    %226 = vst [vmem:[#allocation10 + $0x8] sm:$0xff] %v224
    // Predicated region
    $region38: #{tpu_custom_call.1} parent=1 // pred_check
      _
    $region39: #{tpu_custom_call.1} parent=1 // pred_check_branch
      %228 = sbr.rel (0) target = $region41
    $region40: #{tpu_custom_call.1} parent=1 // pred_region
      %s230 = ssub.s32 256, 256
      %231 = vsyncadd [#allocation4], %s230
      %s233 = sshll.u32 [#allocation10], 4
      %s234 = int_to_ptr.vmem [resolvable:$true] %s233
      %236 = dma.vmem_to_hbm [thread:$0]  %s234, 256, %s5, [#allocation4]
    $region41: #{tpu_custom_call.1} parent=1 // pred_fallthru
      _
    // Predicated region
    $region42: #{tpu_custom_call.1} parent=1 // pred_check
      _
    $region43: #{tpu_custom_call.1} parent=1 // pred_check_branch
      %238 = sbr.rel (0) target = $region45
    $region44: #{tpu_custom_call.1} parent=1 // pred_region
      %239 = dma.done [#allocation4], 256
    $region45: #{tpu_custom_call.1} parent=1 // pred_fallthru
      _
    %240 = vsyncpa [#allocation3], 1
    %241 = vsyncpa [#allocation6], 1
    %242 = vsyncpa [#allocation9], 1
    %243 = vsyncpa [#allocation4], 1

</llo_original>
